<compile_context>
chip_gen: v6e
topology: v6e:2x2x1
jax: 0.10.0
libtpu: 0.0.40
codegen_flags: <defaults>
</compile_context>

<pallas_src>
import math

import jax
import jax.numpy as jnp
from jax.experimental import pallas as pl
from jax.experimental.pallas import tpu as pltpu


# ---------------------------------------------------------------------------
# One-time parameter preparation (NOT in the per-step hot path).
# ---------------------------------------------------------------------------
def prepare_gru_params(wx, bx, wh, bh, compute_dtype=jnp.float32):
    """Fuse the two nn.Linear weights into lane-dense (K, 4H) operands.

    wx : (3H, In)  -- x2h.weight        bx : (3H,)
    wh : (3H, H)   -- h2h.weight        bh : (3H,)

    Column layout of the fused operands: [ r | i | n_x | n_h ].
    The r/i biases are pre-summed; the n_x / n_h biases stay separate because
    bh_n must remain inside resetgate * h_n.
    """
    three_h, In = wx.shape
    H = three_h // 3
    wxT = wx.T.astype(jnp.float32)  # (In, 3H)
    whT = wh.T.astype(jnp.float32)  # (H, 3H)

    wx_f = jnp.zeros((In, 4 * H), jnp.float32)
    wx_f = wx_f.at[:, : 3 * H].set(wxT)                # r_x, i_x, n_x
    wh_f = jnp.zeros((H, 4 * H), jnp.float32)
    wh_f = wh_f.at[:, : 2 * H].set(whT[:, : 2 * H])    # r_h, i_h
    wh_f = wh_f.at[:, 3 * H:].set(whT[:, 2 * H:])      # n_h

    b_f = jnp.concatenate(
        [bx[: 2 * H] + bh[: 2 * H], bx[2 * H:], bh[2 * H:]]
    ).reshape(1, 4 * H).astype(jnp.float32)

    return wx_f.astype(compute_dtype), wh_f.astype(compute_dtype), b_f


# ---------------------------------------------------------------------------
# Shared in-kernel gate math.
# ---------------------------------------------------------------------------
def _gru_gate_math(x, h, wx, wh, b, H):
    """x (B, In) f32, h (B, H) f32, wx/wh in compute dtype, b (1, 4H) f32."""
    cdt = wx.dtype
    g = (jnp.dot(x.astype(cdt), wx, preferred_element_type=jnp.float32)
         + jnp.dot(h.astype(cdt), wh, preferred_element_type=jnp.float32)
         + b)                                           # (B, 4H) float32
    r = jax.nn.sigmoid(g[:, 0 * H:1 * H])
    i = jax.nn.sigmoid(g[:, 1 * H:2 * H])
    n = jnp.tanh(g[:, 2 * H:3 * H] + r * g[:, 3 * H:4 * H])
    return n + i * (h - n)                              # == (1 - i)*n + i*h


# ---------------------------------------------------------------------------
# Single-step cell kernel (exact module.forward semantics).
# ---------------------------------------------------------------------------
def gru_cell_kernel(x_ref, h_ref, wx_ref, wh_ref, b_ref, hy_ref):
    H = h_ref.shape[1]
    hy = _gru_gate_math(x_ref[...].astype(jnp.float32),
                        h_ref[...].astype(jnp.float32),
                        wx_ref[...], wh_ref[...], b_ref[...], H)
    hy_ref[...] = hy.astype(hy_ref.dtype)


def gru_cell(x, hidden, wx_f, wh_f, b_f):
    B, _ = x.shape
    H = hidden.shape[1]
    vmem = pl.BlockSpec(memory_space=pltpu.MemorySpace.VMEM)
    return pl.pallas_call(
        gru_cell_kernel,
        out_shape=jax.ShapeDtypeStruct((B, H), jnp.float32),
        in_specs=[vmem] * 5,
        out_specs=vmem,
    )(x, hidden, wx_f, wh_f, b_f)


# ---------------------------------------------------------------------------
# Fused recurrent sequence kernel: one pallas_call for all timesteps.
# Weights stay resident in VMEM; h is carried in a VMEM scratch buffer.
# ---------------------------------------------------------------------------
def gru_seq_kernel(x_ref, wx_ref, wh_ref, b_ref, h0_ref, hy_ref, h_scratch):
    t = pl.program_id(0)

    @pl.when(t == 0)
    def _():
        h_scratch[...] = h0_ref[...].astype(jnp.float32)

    H = h_scratch.shape[1]
    h = h_scratch[...]
    hy = _gru_gate_math(x_ref[0].astype(jnp.float32), h,
                        wx_ref[...], wh_ref[...], b_ref[...], H)
    h_scratch[...] = hy
    hy_ref[0] = hy.astype(hy_ref.dtype)


def gru_sequence(xs, h0, wx_f, wh_f, b_f):
    """xs: (T, B, In), h0: (B, H) -> (T, B, H) hidden states for all steps."""
    T, B, In = xs.shape
    H = h0.shape[1]
    four_h = wx_f.shape[1]
    return pl.pallas_call(
        gru_seq_kernel,
        out_shape=jax.ShapeDtypeStruct((T, B, H), jnp.float32),
        grid_spec=pltpu.PrefetchScalarGridSpec(
            num_scalar_prefetch=0,
            grid=(T,),
            in_specs=[
                pl.BlockSpec((1, B, In), lambda t: (t, 0, 0)),   # stream x_t
                pl.BlockSpec((In, four_h), lambda t: (0, 0)),    # resident W_x
                pl.BlockSpec((H, four_h), lambda t: (0, 0)),     # resident W_h
                pl.BlockSpec((1, four_h), lambda t: (0, 0)),     # resident bias
                pl.BlockSpec((B, H), lambda t: (0, 0)),          # resident h0
            ],
            out_specs=pl.BlockSpec((1, B, H), lambda t: (t, 0, 0)),
            scratch_shapes=[pltpu.VMEM((B, H), jnp.float32)],    # carried h
        ),
        compiler_params=pltpu.CompilerParams(
            dimension_semantics=("arbitrary",)),                 # time is sequential
    )(xs, wx_f, wh_f, b_f, h0)


# ---------------------------------------------------------------------------
# Pure-JAX references (mirror the PyTorch forward).
# ---------------------------------------------------------------------------
def gru_cell_ref(x, hidden, wx, bx, wh, bh):
    gate_x = x @ wx.T + bx
    gate_h = hidden @ wh.T + bh
    H = hidden.shape[1]
    i_r, i_i, i_n = gate_x[:, :H], gate_x[:, H:2 * H], gate_x[:, 2 * H:]
    h_r, h_i, h_n = gate_h[:, :H], gate_h[:, H:2 * H], gate_h[:, 2 * H:]
    r = jax.nn.sigmoid(i_r + h_r)
    i = jax.nn.sigmoid(i_i + h_i)
    n = jnp.tanh(i_n + r * h_n)
    return (1.0 - i) * n + i * hidden


def gru_sequence_ref(xs, h0, wx, bx, wh, bh):
    h = h0
    outs = []
    for t in range(xs.shape[0]):
        h = gru_cell_ref(xs[t], h, wx, bx, wh, bh)
        outs.append(h)
    return jnp.stack(outs, axis=0)


if __name__ == "__main__":
    key = jax.random.PRNGKey(0)

    B = 8      # batch
    IN = 16    # inplance (input feature size)
    H = 32     # hidden_size
    T = 8      # sequence length for the fused sequence kernel

    k_x, k_xs, k_h, k_wx, k_bx, k_wh, k_bh = jax.random.split(key, 7)

    # Deterministic init matching reset_parameters(): uniform(-std, std).
    std = 1.0 / math.sqrt(H)
    wx = jax.random.uniform(k_wx, (3 * H, IN), jnp.float32, -std, std)
    bx = jax.random.uniform(k_bx, (3 * H,), jnp.float32, -std, std)
    wh = jax.random.uniform(k_wh, (3 * H, H), jnp.float32, -std, std)
    bh = jax.random.uniform(k_bh, (3 * H,), jnp.float32, -std, std)

    x = jax.random.normal(k_x, (B, IN), jnp.float32)
    xs = jax.random.normal(k_xs, (T, B, IN), jnp.float32)
    hidden = jax.random.normal(k_h, (B, H), jnp.float32)

    # ---- float32 compute path: tight checks -------------------------------
    wx_f, wh_f, b_f = prepare_gru_params(wx, bx, wh, bh, jnp.float32)

    hy = jax.block_until_ready(gru_cell(x, hidden, wx_f, wh_f, b_f))
    hy_ref = gru_cell_ref(x, hidden, wx, bx, wh, bh)
    assert hy.shape == (B, H)
    assert jnp.allclose(hy, hy_ref, atol=1e-5, rtol=1e-5), "cell mismatch"

    hs = jax.block_until_ready(gru_sequence(xs, hidden, wx_f, wh_f, b_f))
    hs_ref = gru_sequence_ref(xs, hidden, wx, bx, wh, bh)
    assert hs.shape == (T, B, H)
    assert jnp.allclose(hs, hs_ref, atol=1e-5, rtol=1e-5), "sequence mismatch"

    # ---- bfloat16 matmul operands (f32 accumulation): loose check ----------
    wx_b, wh_b, b_b = prepare_gru_params(wx, bx, wh, bh, jnp.bfloat16)
    hs_bf16 = jax.block_until_ready(gru_sequence(xs, hidden, wx_b, wh_b, b_b))
    assert jnp.allclose(hs_bf16, hs_ref, atol=5e-2, rtol=5e-2), "bf16 mismatch"

    print("KERNEL_OK")
</pallas_src>

<mosaic_0001>
module attributes {stable_mosaic.version = 11 : i64} {
  func.func @gru_cell_kernel(%arg0: memref<8x16xf32, #tpu.memory_space<vmem>>, %arg1: memref<8x32xf32, #tpu.memory_space<vmem>>, %arg2: memref<16x128xf32, #tpu.memory_space<vmem>>, %arg3: memref<32x128xf32, #tpu.memory_space<vmem>>, %arg4: memref<1x128xf32, #tpu.memory_space<vmem>>, %arg5: memref<8x32xf32, #tpu.memory_space<vmem>>) attributes {dimension_semantics = [], scalar_prefetch = 0 : i64, scratch_operands = 0 : i64, tpu.core_type = #tpu.core_type<tc>} {
    %c0 = arith.constant 0 : index
    %c0_0 = arith.constant 0 : index
    %0 = vector.load %arg0[%c0, %c0_0] : memref<8x16xf32, #tpu.memory_space<vmem>>, vector<8x16xf32>
    %c0_1 = arith.constant 0 : index
    %c0_2 = arith.constant 0 : index
    %1 = vector.load %arg1[%c0_1, %c0_2] : memref<8x32xf32, #tpu.memory_space<vmem>>, vector<8x32xf32>
    %c0_3 = arith.constant 0 : index
    %c0_4 = arith.constant 0 : index
    %2 = vector.load %arg2[%c0_3, %c0_4] : memref<16x128xf32, #tpu.memory_space<vmem>>, vector<16x128xf32>
    %c0_5 = arith.constant 0 : index
    %c0_6 = arith.constant 0 : index
    %3 = vector.load %arg3[%c0_5, %c0_6] : memref<32x128xf32, #tpu.memory_space<vmem>>, vector<32x128xf32>
    %c0_7 = arith.constant 0 : index
    %c0_8 = arith.constant 0 : index
    %4 = vector.load %arg4[%c0_7, %c0_8] : memref<1x128xf32, #tpu.memory_space<vmem>>, vector<1x128xf32>
    %cst = arith.constant dense<0.000000e+00> : vector<8x128xf32>
    %5 = tpu.matmul %0, %2, %cst {dimension_numbers = #tpu.dot_dimension_numbers<[1], [0], [0], [1], [0, 0, 1, 1], [], []>} : vector<8x16xf32>, vector<16x128xf32>, vector<8x128xf32> -> vector<8x128xf32>
    %cst_9 = arith.constant dense<0.000000e+00> : vector<8x128xf32>
    %6 = tpu.matmul %1, %3, %cst_9 {dimension_numbers = #tpu.dot_dimension_numbers<[1], [0], [0], [1], [0, 0, 1, 1], [], []>} : vector<8x32xf32>, vector<32x128xf32>, vector<8x128xf32> -> vector<8x128xf32>
    %7 = arith.addf %5, %6 : vector<8x128xf32>
    %8 = vector.broadcast %4 : vector<1x128xf32> to vector<8x128xf32>
    %9 = arith.addf %7, %8 : vector<8x128xf32>
    %10 = vector.extract_strided_slice %9 {offsets = [0, 0], sizes = [8, 32], strides = [1, 1]} : vector<8x128xf32> to vector<8x32xf32>
    %11 = arith.negf %10 : vector<8x32xf32>
    %12 = math.exp %11 : vector<8x32xf32>
    %cst_10 = arith.constant 1.000000e+00 : f32
    %13 = vector.broadcast %cst_10 : f32 to vector<8x32xf32>
    %14 = arith.addf %13, %12 : vector<8x32xf32>
    %15 = arith.divf %13, %14 : vector<8x32xf32>
    %16 = vector.extract_strided_slice %9 {offsets = [0, 32], sizes = [8, 32], strides = [1, 1]} : vector<8x128xf32> to vector<8x32xf32>
    %17 = arith.negf %16 : vector<8x32xf32>
    %18 = math.exp %17 : vector<8x32xf32>
    %cst_11 = arith.constant 1.000000e+00 : f32
    %19 = vector.broadcast %cst_11 : f32 to vector<8x32xf32>
    %20 = arith.addf %19, %18 : vector<8x32xf32>
    %21 = arith.divf %19, %20 : vector<8x32xf32>
    %22 = vector.extract_strided_slice %9 {offsets = [0, 64], sizes = [8, 32], strides = [1, 1]} : vector<8x128xf32> to vector<8x32xf32>
    %23 = vector.extract_strided_slice %9 {offsets = [0, 96], sizes = [8, 32], strides = [1, 1]} : vector<8x128xf32> to vector<8x32xf32>
    %24 = arith.mulf %15, %23 : vector<8x32xf32>
    %25 = arith.addf %22, %24 : vector<8x32xf32>
    %26 = math.tanh %25 : vector<8x32xf32>
    %27 = arith.subf %1, %26 : vector<8x32xf32>
    %28 = arith.mulf %21, %27 : vector<8x32xf32>
    %29 = arith.addf %26, %28 : vector<8x32xf32>
    %c0_12 = arith.constant 0 : index
    %c0_13 = arith.constant 0 : index
    %30 = vector.load %arg5[%c0_12, %c0_13] : memref<8x32xf32, #tpu.memory_space<vmem>>, vector<8x32xf32>
    tpu.vector_store %arg5[%c0_12, %c0_13], %29 {strides = array<i32>} : memref<8x32xf32, #tpu.memory_space<vmem>>, vector<8x32xf32>,
    return
  }
}

</mosaic_0001>

<llo_original>
// kernel: tpu_custom_call.1
$region0: #{tpu_custom_call.1}
  #allocation0 [shape = 'u32[]', space=smem, size = 0x4, offset = 0x4, fixed_abs, tag = 'smem constant byte address 0x4 - core index']
  #allocation1 [shape = 'u32[144,128]{1,0:T(1,128)}', space=vmem, size = 0x12000, scoped, tag = 'internal scratch']
  %s0 = inlined_call_operand.hbm [shape: f32[8,16], index: 0, kind: input, shape index: {}]
  %s1 = inlined_call_operand.hbm [shape: f32[8,32], index: 1, kind: input, shape index: {}]
  %s2 = inlined_call_operand.hbm [shape: f32[16,128], index: 2, kind: input, shape index: {}]
  %s3 = inlined_call_operand.hbm [shape: f32[32,128], index: 3, kind: input, shape index: {}]
  %s4 = inlined_call_operand.vmem [shape: f32[1,128], index: 4, kind: input, shape index: {}]
  %s5 = inlined_call_operand.hbm [shape: f32[8,32], index: 5, kind: output, shape index: {}]
  %s6 = sld [smem:[#allocation0]]
  $region46: #{tpu_custom_call.1} parent=0
    _
  %s8 = ssub.s32 1, %s6
  %s9 = scalar_select 0, %s8, %s6
  $region1: #{tpu_custom_call.1} parent=0
    #allocation2 [shape = 'u8[4096]{0}', space=vmem, size = 0x1000, scoped, tag = 'input window, operand 0, single buffered']
    #allocation3 [shape = 's32[1]{0}', space=sflag, size = 0x4, scoped, tag = 'scoped memory for tpu_custom_call.1']
    #allocation4 [shape = 's32[1]{0}', space=sflag, size = 0x4, scoped, tag = 'scoped memory for tpu_custom_call.1']
    #allocation5 [shape = 'u8[4096]{0}', space=vmem, size = 0x1000, scoped, tag = 'input window, operand 1, single buffered']
    #allocation6 [shape = 's32[1]{0}', space=sflag, size = 0x4, scoped, tag = 'scoped memory for tpu_custom_call.1']
    #allocation7 [shape = 'u8[8192]{0}', space=vmem, size = 0x2000, scoped, tag = 'input window, operand 2, single buffered']
    #allocation8 [shape = 'u8[16384]{0}', space=vmem, size = 0x4000, scoped, tag = 'input window, operand 3, single buffered']
    #allocation9 [shape = 's32[1]{0}', space=sflag, size = 0x4, scoped, tag = 'scoped memory for tpu_custom_call.1']
    #allocation10 [shape = 'u8[4096]{0}', space=vmem, size = 0x1000, scoped, tag = 'output window, operand 0, single buffered']
    %10 = vsyncpa [#allocation3], 0
    %11 = vsyncpa [#allocation6], 0
    %12 = vsyncpa [#allocation9], 0
    %13 = vsyncpa [#allocation4], 0
    // Predicated region
    $region2: #{tpu_custom_call.1} parent=1 // pred_check
      _
    $region3: #{tpu_custom_call.1} parent=1 // pred_check_branch
      %15 = sbr.rel (0) target = $region5
    $region4: #{tpu_custom_call.1} parent=1 // pred_region
      %s17 = ssub.s32 128, 128
      %18 = vsyncadd [#allocation3], %s17
      %s20 = sshll.u32 [#allocation2], 4
      %s21 = int_to_ptr.vmem [resolvable:$true] %s20
      %23 = dma.hbm_to_vmem [thread:$0]  %s0, 128, %s21, [#allocation3]
    $region5: #{tpu_custom_call.1} parent=1 // pred_fallthru
      _
    // Predicated region
    $region6: #{tpu_custom_call.1} parent=1 // pred_check
      _
    $region7: #{tpu_custom_call.1} parent=1 // pred_check_branch
      %25 = sbr.rel (0) target = $region9
    $region8: #{tpu_custom_call.1} parent=1 // pred_region
      %s27 = ssub.s32 128, 128
      %28 = vsyncadd [#allocation6], %s27
      %s30 = sshll.u32 [#allocation5], 4
      %s31 = int_to_ptr.vmem [resolvable:$true] %s30
      %33 = dma.hbm_to_vmem [thread:$0]  %s1, 128, %s31, [#allocation6]
    $region9: #{tpu_custom_call.1} parent=1 // pred_fallthru
      _
    // Predicated region
    $region10: #{tpu_custom_call.1} parent=1 // pred_check
      _
    $region11: #{tpu_custom_call.1} parent=1 // pred_check_branch
      %35 = sbr.rel (0) target = $region13
    $region12: #{tpu_custom_call.1} parent=1 // pred_region
      %s37 = ssub.s32 256, 256
      %38 = vsyncadd [#allocation6], %s37
      %s39 = sshll.u32 [#allocation7], 4
      %s40 = int_to_ptr.vmem [resolvable:$true] %s39
      %45 = dma.hbm_to_vmem [thread:$0]  %s2, 256, %s40, [#allocation6], 128, 128, 8
    $region13: #{tpu_custom_call.1} parent=1 // pred_fallthru
      _
    // Predicated region
    $region14: #{tpu_custom_call.1} parent=1 // pred_check
      _
    $region15: #{tpu_custom_call.1} parent=1 // pred_check_branch
      %47 = sbr.rel (0) target = $region17
    $region16: #{tpu_custom_call.1} parent=1 // pred_region
      %s49 = ssub.s32 512, 512
      %50 = vsyncadd [#allocation9], %s49
      %s51 = sshll.u32 [#allocation8], 4
      %s52 = int_to_ptr.vmem [resolvable:$true] %s51
      %57 = dma.hbm_to_vmem [thread:$0]  %s3, 512, %s52, [#allocation9], 128, 128, 8
    $region17: #{tpu_custom_call.1} parent=1 // pred_fallthru
      _
    // Predicated region
    $region18: #{tpu_custom_call.1} parent=1 // pred_check
      _
    $region19: #{tpu_custom_call.1} parent=1 // pred_check_branch
      %59 = sbr.rel (0) target = $region21
    $region20: #{tpu_custom_call.1} parent=1 // pred_region
      _
    $region21: #{tpu_custom_call.1} parent=1 // pred_fallthru
      _
    // Predicated region
    $region22: #{tpu_custom_call.1} parent=1 // pred_check
      _
    $region23: #{tpu_custom_call.1} parent=1 // pred_check_branch
      %61 = sbr.rel (0) target = $region25
    $region24: #{tpu_custom_call.1} parent=1 // pred_region
      %62 = dma.done [#allocation3], 128
    $region25: #{tpu_custom_call.1} parent=1 // pred_fallthru
      _
    // Predicated region
    $region26: #{tpu_custom_call.1} parent=1 // pred_check
      _
    $region27: #{tpu_custom_call.1} parent=1 // pred_check_branch
      %64 = sbr.rel (0) target = $region29
    $region28: #{tpu_custom_call.1} parent=1 // pred_region
      %65 = dma.done [#allocation6], 128
    $region29: #{tpu_custom_call.1} parent=1 // pred_fallthru
      _
    // Predicated region
    $region30: #{tpu_custom_call.1} parent=1 // pred_check
      _
    $region31: #{tpu_custom_call.1} parent=1 // pred_check_branch
      %67 = sbr.rel (0) target = $region33
    $region32: #{tpu_custom_call.1} parent=1 // pred_region
      %68 = dma.done [#allocation6], 256
    $region33: #{tpu_custom_call.1} parent=1 // pred_fallthru
      _
    // Predicated region
    $region34: #{tpu_custom_call.1} parent=1 // pred_check
      _
    $region35: #{tpu_custom_call.1} parent=1 // pred_check_branch
      %70 = sbr.rel (0) target = $region37
    $region36: #{tpu_custom_call.1} parent=1 // pred_region
      %71 = dma.done [#allocation9], 512
    $region37: #{tpu_custom_call.1} parent=1 // pred_fallthru
      _
    %v72 = vld [vmem:[#allocation2] sm:$0xff]
    %v73 = vld [vmem:[#allocation5] sm:$0xff]
    %v74 = vld [vmem:[#allocation7] sm:$0xff]
    %v75 = vld [vmem:[#allocation7 + $0x8] sm:$0xff]
    %v76 = vld [vmem:[#allocation8] sm:$0xff]
    %v77 = vld [vmem:[#allocation8 + $0x8] sm:$0xff]
    %v78 = vld [vmem:[#allocation8 + $0x10] sm:$0xff]
    %v79 = vld [vmem:[#allocation8 + $0x18] sm:$0xff]
    %v80 = vld [vmem:[%s4] sm:$0x1]
    %vm81 = vcmask 261120
    %v83 = vsel %vm81, %v73, 0
    %85 = vmatprep.subr.mxu0 0.0
    %86 = vmatpush1.msra.mxu0 0.0
    %87 = vmatprep.subr.mxu0 0.0
    %88 = vmatpush1.msra.mxu0 0.0
    %89 = vmatprep.subr.mxu0 0.0
    %90 = vmatpush1.msra.mxu0 0.0
    %91 = vmatprep.subr.mxu0 0.0
    %92 = vmatpush1.msra.mxu0 0.0
    %93 = vmatprep.subr.mxu0 0.0
    %94 = vmatpush1.msra.mxu0 0.0
    %95 = vmatprep.subr.mxu0 0.0
    %96 = vmatpush1.msra.mxu0 0.0
    %97 = vmatprep.subr.mxu0 0.0
    %98 = vmatpush1.msra.mxu0 0.0
    %99 = vmatprep.subr.mxu0 0.0
    %100 = vmatpush1.msra.mxu0 0.0
    %101 = vmatprep.subr.mxu0 0.0
    %102 = vmatpush1.msra.mxu0 0.0
    %103 = vmatprep.subr.mxu0 0.0
    %104 = vmatpush1.msra.mxu0 0.0
    %105 = vmatprep.subr.mxu0 0.0
    %106 = vmatpush1.msra.mxu0 0.0
    %107 = vmatprep.subr.mxu0 0.0
    %108 = vmatpush1.msra.mxu0 0.0
    %109 = vmatprep.subr.mxu0 0.0
    %110 = vmatpush1.msra.mxu0 %v79
    %111 = vmatprep.subr.mxu0 0.0
    %112 = vmatpush1.msra.mxu0 %v78
    %113 = vmatprep.subr.mxu0 0.0
    %114 = vmatpush1.msra.mxu0 %v77
    %115 = vmatprep.subr.mxu0 0.0
    %116 = vmatpush1.msra.mxu0 %v76
    %117 = vmatprep.subr.mxu0 0.0
    %118 = vmatpush2.msra.mxu0 0.0
    %119 = vmatprep.subr.mxu0 0.0
    %120 = vmatpush2.msra.mxu0 0.0
    %121 = vmatprep.subr.mxu0 0.0
    %122 = vmatpush2.msra.mxu0 0.0
    %123 = vmatprep.subr.mxu0 0.0
    %124 = vmatpush2.msra.mxu0 0.0
    %125 = vmatprep.subr.mxu0 0.0
    %126 = vmatpush2.msra.mxu0 0.0
    %127 = vmatprep.subr.mxu0 0.0
    %128 = vmatpush2.msra.mxu0 0.0
    %129 = vmatprep.subr.mxu0 0.0
    %130 = vmatpush2.msra.mxu0 0.0
    %131 = vmatprep.subr.mxu0 0.0
    %132 = vmatpush2.msra.mxu0 0.0
    %133 = vmatprep.subr.mxu0 0.0
    %134 = vmatpush2.msra.mxu0 0.0
    %135 = vmatprep.subr.mxu0 0.0
    %136 = vmatpush2.msra.mxu0 0.0
    %137 = vmatprep.subr.mxu0 0.0
    %138 = vmatpush2.msra.mxu0 0.0
    %139 = vmatprep.subr.mxu0 0.0
    %140 = vmatpush2.msra.mxu0 0.0
    %141 = vmatprep.subr.mxu0 0.0
    %142 = vmatpush2.msra.mxu0 0.0
    %143 = vmatprep.subr.mxu0 0.0
    %144 = vmatpush2.msra.mxu0 0.0
    %145 = vmatprep.subr.mxu0 0.0
    %146 = vmatpush2.msra.mxu0 0.0
    %147 = vmatprep.subr.mxu0 0.0
    %148 = vmatpush2.msra.mxu0 0.0
    %149 = vmatprep.mubr.f32.mxu0 0.0
    %150 = vmatmul.mubr.f32.gmra.mxu0 %v83
    %v151 = vpop.f32.mrf.mxu0
    %v152 = vadd.f32 0.0, %v151
    %v153 = vpop.f32.mrf.mxu0
    %154 = vdwg.mxu0
    %vm155 = vcmask 130048
    %v157 = vsel %vm155, %v72, 0
    %159 = vmatprep.subr.mxu0 0.0
    %160 = vmatpush1.msra.mxu0 0.0
    %161 = vmatprep.subr.mxu0 0.0
    %162 = vmatpush1.msra.mxu0 0.0
    %163 = vmatprep.subr.mxu0 0.0
    %164 = vmatpush1.msra.mxu0 0.0
    %165 = vmatprep.subr.mxu0 0.0
    %166 = vmatpush1.msra.mxu0 0.0
    %167 = vmatprep.subr.mxu0 0.0
    %168 = vmatpush1.msra.mxu0 0.0
    %169 = vmatprep.subr.mxu0 0.0
    %170 = vmatpush1.msra.mxu0 0.0
    %171 = vmatprep.subr.mxu0 0.0
    %172 = vmatpush1.msra.mxu0 0.0
    %173 = vmatprep.subr.mxu0 0.0
    %174 = vmatpush1.msra.mxu0 0.0
    %175 = vmatprep.subr.mxu0 0.0
    %176 = vmatpush1.msra.mxu0 0.0
    %177 = vmatprep.subr.mxu0 0.0
    %178 = vmatpush1.msra.mxu0 0.0
    %179 = vmatprep.subr.mxu0 0.0
    %180 = vmatpush1.msra.mxu0 0.0
    %181 = vmatprep.subr.mxu0 0.0
    %182 = vmatpush1.msra.mxu0 0.0
    %183 = vmatprep.subr.mxu0 0.0
    %184 = vmatpush1.msra.mxu0 0.0
    %185 = vmatprep.subr.mxu0 0.0
    %186 = vmatpush1.msra.mxu0 0.0
    %187 = vmatprep.subr.mxu0 0.0
    %188 = vmatpush1.msra.mxu0 %v75
    %189 = vmatprep.subr.mxu0 0.0
    %190 = vmatpush1.msra.mxu0 %v74
    %191 = vmatprep.subr.mxu0 0.0
    %192 = vmatpush2.msra.mxu0 0.0
    %193 = vmatprep.subr.mxu0 0.0
    %194 = vmatpush2.msra.mxu0 0.0
    %195 = vmatprep.subr.mxu0 0.0
    %196 = vmatpush2.msra.mxu0 0.0
    %197 = vmatprep.subr.mxu0 0.0
    %198 = vmatpush2.msra.mxu0 0.0
    %199 = vmatprep.subr.mxu0 0.0
    %200 = vmatpush2.msra.mxu0 0.0
    %201 = vmatprep.subr.mxu0 0.0
    %202 = vmatpush2.msra.mxu0 0.0
    %203 = vmatprep.subr.mxu0 0.0
    %204 = vmatpush2.msra.mxu0 0.0
    %205 = vmatprep.subr.mxu0 0.0
    %206 = vmatpush2.msra.mxu0 0.0
    %207 = vmatprep.subr.mxu0 0.0
    %208 = vmatpush2.msra.mxu0 0.0
    %209 = vmatprep.subr.mxu0 0.0
    %210 = vmatpush2.msra.mxu0 0.0
    %211 = vmatprep.subr.mxu0 0.0
    %212 = vmatpush2.msra.mxu0 0.0
    %213 = vmatprep.subr.mxu0 0.0
    %214 = vmatpush2.msra.mxu0 0.0
    %215 = vmatprep.subr.mxu0 0.0
    %216 = vmatpush2.msra.mxu0 0.0
    %217 = vmatprep.subr.mxu0 0.0
    %218 = vmatpush2.msra.mxu0 0.0
    %219 = vmatprep.subr.mxu0 0.0
    %220 = vmatpush2.msra.mxu0 0.0
    %221 = vmatprep.subr.mxu0 0.0
    %222 = vmatpush2.msra.mxu0 0.0
    %223 = vmatprep.mubr.f32.mxu0 0.0
    %224 = vmatmul.mubr.f32.gmra.mxu0 %v157
    %v225 = vpop.f32.mrf.mxu0
    %v226 = vadd.f32 %v152, %v225
    %v227 = vpop.f32.mrf.mxu0
    %228 = vdwg.mxu0
    %v230 = vlaneseq
    %v231 = vshrl.u32 %v230, 7
    %v232 = vsub.s32 0, %v231
    %v233 = vrot.slane %v80, %v232
    %v235 = vadd.f32 %v226, %v233
    %v236 = vxor.u32 %v235, 2147483648
    %v237 = vmul.f32 %v236, 1.442695
    %v238 = vpow.pop %v237
    %v239 = vadd.f32 %v238, 1.0
    %v240 = vrcp.pop %v239
    %v241 = vmul.f32 1.0, %v240
    %243 = vrot.lane.b32.xlu0 %v235, 32
    %v244 = vpop.permute.xlu0 %243
    %v246 = vmul.f32 %v241, %v244
    %248 = vrot.lane.b32.xlu0 %v246, 64
    %v249 = vpop.permute.xlu0 %248
    %v251 = vadd.f32 %v235, %v249
    %v252 = vtanh.pop %v251
    %254 = vrot.lane.b32.xlu0 %v252, 64
    %v255 = vpop.permute.xlu0 %254
    %v257 = vsub.f32 %v73, %v255
    %259 = vrot.lane.b32.xlu0 %v257, 32
    %v260 = vpop.permute.xlu0 %259
    %v262 = vmul.f32 %v241, %v260
    %264 = vrot.lane.b32.xlu0 %v262, 32
    %v265 = vpop.permute.xlu0 %264
    %v267 = vadd.f32 %v252, %v265
    %269 = vrot.lane.b32.xlu0 %v267, 64
    %v270 = vpop.permute.xlu0 %269
    %272 = vst.msk [vmem:[#allocation10] sm:$0xff] %vm81, %v270
    // Predicated region
    $region38: #{tpu_custom_call.1} parent=1 // pred_check
      _
    $region39: #{tpu_custom_call.1} parent=1 // pred_check_branch
      %274 = sbr.rel (0) target = $region41
    $region40: #{tpu_custom_call.1} parent=1 // pred_region
      %s276 = ssub.s32 128, 128
      %277 = vsyncadd [#allocation4], %s276
      %s279 = sshll.u32 [#allocation10], 4
      %s280 = int_to_ptr.vmem [resolvable:$true] %s279
      %282 = dma.vmem_to_hbm [thread:$0]  %s280, 128, %s5, [#allocation4]
    $region41: #{tpu_custom_call.1} parent=1 // pred_fallthru
      _
    // Predicated region
    $region42: #{tpu_custom_call.1} parent=1 // pred_check
      _
    $region43: #{tpu_custom_call.1} parent=1 // pred_check_branch
      %284 = sbr.rel (0) target = $region45
    $region44: #{tpu_custom_call.1} parent=1 // pred_region
      %285 = dma.done [#allocation4], 128
    $region45: #{tpu_custom_call.1} parent=1 // pred_fallthru
      _
    %286 = vsyncpa [#allocation3], 1
    %287 = vsyncpa [#allocation6], 1
    %288 = vsyncpa [#allocation9], 1
    %289 = vsyncpa [#allocation4], 1

</llo_original>
